<compile_context>
chip_gen: v7x
topology: tpu7x:2x2x1
jax: 0.10.0
libtpu: 0.0.40
codegen_flags: <defaults>
</compile_context>

<pallas_src>
import functools

import jax
import jax.numpy as jnp
from jax.experimental import pallas as pl
from jax.experimental.pallas import tpu as pltpu

_MIB = 1024 * 1024


def _round_up(x, m):
    return ((x + m - 1) // m) * m


@functools.lru_cache(maxsize=None)
def _vmem_limit_bytes():
    """Per-generation VMEM budget with headroom for compiler-internal scratch.

    v7x has 64 MiB/TC -> 48 MiB limit; v5e/v6e have 128 MiB -> 100 MiB limit.
    Falls back to the conservative (v7x) budget if the query is unavailable.
    """
    try:
        cap = int(pltpu.get_tpu_info().vmem_capacity_bytes)
    except Exception:
        cap = 64 * _MIB
    return int(min(cap - 16 * _MIB, 100 * _MIB))


def _pick_divisor_tile(dim, max_tile, align):
    """Pad `dim` only up to `align`, then take the largest tile (multiple of
    `align`, <= max_tile) that divides the aligned dim exactly.  Avoids
    re-padding the static weight matrix to a full tile on every call."""
    dim_p = _round_up(dim, align)
    t = min(max_tile, dim_p)
    t = max(align, t - t % align)
    while dim_p % t != 0:
        t -= align
    return t, dim_p


def _lense_a_kernel(x_ref, w_ref, b_ref, o_ref):
    """Grid = (Mp//tm, Vp//tn, Kp//tk); K (= folded head*d_model) is the reduction.

    x_ref : (tm, tk) bf16  row tile i, K tile k
    w_ref : (tk, tn) bf16  K tile k, vocab tile j
    b_ref : (1,  tn) f32   head-summed bias, vocab tile j
    o_ref : (tm, tn) f32   output tile, resident across the K axis; doubles as
                           the accumulator (no separate VMEM scratch).
    """
    k = pl.program_id(2)

    @pl.when(k == 0)
    def _():
        # Fold the bias into the accumulator init: it is added exactly once,
        # and no finalize branch is needed (output dtype is already f32).
        o_ref[...] = jnp.broadcast_to(b_ref[...], o_ref.shape)

    o_ref[...] += jnp.dot(
        x_ref[...], w_ref[...], preferred_element_type=jnp.float32
    )


@functools.partial(jax.jit, static_argnames=("tm_max", "tn_max", "tk_max"))
def lense_a_forward(x, weights, biases, *, tm_max=512, tn_max=2048, tk_max=1024):
    """x: (batch, pos, n_head, d_model)
    weights: (n_head, d_model, d_vocab)   (per-head unembed; Linear weight = unembed.T)
    biases : (n_head, d_vocab)
    returns: (batch, pos, d_vocab) float32
    """
    batch, pos, n_head, d_model = x.shape
    _, _, d_vocab = weights.shape
    M = batch * pos
    K = n_head * d_model

    # --- Tile selection ------------------------------------------------------
    # M: pad to a full tile (activation padding is cheap vs. weight streaming).
    # K/V: pad only to (8,128) alignment and pick tiles dividing the aligned
    # dims so the weight matrix needs no per-call tile padding in the common
    # (128-aligned) case.
    tm = min(tm_max, _round_up(M, 8))
    Mp = _round_up(M, tm)
    tk, Kp = _pick_divisor_tile(K, tk_max, 128)
    tn, Vp = _pick_divisor_tile(d_vocab, tn_max, 128)

    # --- Operand prep (fused under jit) ---------------------------------------
    # bf16 operands: at default precision the MXU computes in bf16 anyway, so
    # this halves HBM/VMEM traffic; accumulation stays f32 in the kernel.
    # TODO(synk): pre-cast/pad the (static) weights outside the per-call path
    # when this forward is invoked repeatedly with the same weights.
    x2d = x.reshape(M, K).astype(jnp.bfloat16)          # contiguous reshape
    w2d = weights.reshape(K, d_vocab).astype(jnp.bfloat16)
    b_row = jnp.sum(biases.astype(jnp.float32), axis=0).reshape(1, d_vocab)

    if (Mp, Kp) != (M, K):
        x2d = jnp.pad(x2d, ((0, Mp - M), (0, Kp - K)))
    if (Kp, Vp) != (K, d_vocab):
        w2d = jnp.pad(w2d, ((0, Kp - K), (0, Vp - d_vocab)))
    if Vp != d_vocab:
        b_row = jnp.pad(b_row, ((0, 0), (0, Vp - d_vocab)))

    grid = (Mp // tm, Vp // tn, Kp // tk)

    cost = pl.CostEstimate(
        flops=2 * Mp * Kp * Vp,
        transcendentals=0,
        bytes_accessed=Mp * Kp * 2 + Kp * Vp * 2 + Mp * Vp * 4,
    )

    out = pl.pallas_call(
        _lense_a_kernel,
        out_shape=jax.ShapeDtypeStruct((Mp, Vp), jnp.float32),
        grid_spec=pltpu.PrefetchScalarGridSpec(
            num_scalar_prefetch=0,
            grid=grid,
            in_specs=[
                pl.BlockSpec((tm, tk), lambda i, j, k: (i, k)),
                pl.BlockSpec((tk, tn), lambda i, j, k: (k, j)),
                pl.BlockSpec((1, tn), lambda i, j, k: (0, j)),
            ],
            out_specs=pl.BlockSpec((tm, tn), lambda i, j, k: (i, j)),
        ),
        compiler_params=pltpu.CompilerParams(
            dimension_semantics=("parallel", "parallel", "arbitrary"),
            vmem_limit_bytes=_vmem_limit_bytes(),
        ),
        cost_estimate=cost,
    )(x2d, w2d, b_row)

    # Slice off padding; contiguous reshape back to (batch, pos, d_vocab).
    return out[:M, :d_vocab].reshape(batch, pos, d_vocab)


def lense_a_reference(x, weights, biases):
    # Pure-JAX reference of the PyTorch forward (true f32 matmul):
    # out[b,p,:] = sum_h (x[b,p,h,:] @ W_h + b_h)
    out = jnp.einsum("bphd,hdv->bpv", x, weights,
                     precision=jax.lax.Precision.HIGHEST)
    return out + jnp.sum(biases, axis=0)


def _make_inputs(key, batch, pos, n_head, d_model, d_vocab, shared_heads=True):
    k_x, k_u, k_b = jax.random.split(key, 3)
    x = jax.random.normal(k_x, (batch, pos, n_head, d_model), dtype=jnp.float32)
    if shared_heads:
        # Module __init__: every head's Linear is initialized from the same
        # unembed (d_model, d_vocab) and bias (d_vocab,).  Linear weight is
        # unembed.T, so forward computes x @ unembed + bias per head.
        unembed = jax.random.normal(k_u, (d_model, d_vocab), jnp.float32) * 0.02
        bias = jax.random.normal(k_b, (d_vocab,), jnp.float32) * 0.01
        weights = jnp.broadcast_to(unembed, (n_head, d_model, d_vocab))
        biases = jnp.broadcast_to(bias, (n_head, d_vocab))
    else:
        # Per-head distinct parameters (e.g. after training) — the forward
        # handles the general case.
        weights = jax.random.normal(k_u, (n_head, d_model, d_vocab), jnp.float32) * 0.02
        biases = jax.random.normal(k_b, (n_head, d_vocab), jnp.float32) * 0.01
    return x, weights, biases


if __name__ == "__main__":
    # Case 1: the original toy shape (everything already tile-aligned).
    x, w, b = _make_inputs(jax.random.PRNGKey(0), batch=2, pos=8, n_head=4,
                           d_model=32, d_vocab=128)
    out = jax.block_until_ready(lense_a_forward(x, w, b))
    ref = lense_a_reference(x, w, b)
    assert out.shape == (2, 8, 128)
    assert jnp.allclose(out, ref, atol=2e-2, rtol=2e-2), float(
        jnp.max(jnp.abs(out - ref)))

    # Case 2: awkward (non-128-multiple) shapes — exercises the padding path.
    x2, w2, b2 = _make_inputs(jax.random.PRNGKey(1), batch=2, pos=7, n_head=3,
                              d_model=24, d_vocab=200)
    out2 = jax.block_until_ready(lense_a_forward(x2, w2, b2))
    ref2 = lense_a_reference(x2, w2, b2)
    assert out2.shape == (2, 7, 200)
    assert jnp.allclose(out2, ref2, atol=2e-2, rtol=2e-2), float(
        jnp.max(jnp.abs(out2 - ref2)))

    # Case 3: per-head distinct weights, forced small tiles so every grid axis
    # (including the K reduction / bias-init path) takes multiple steps.
    x3, w3, b3 = _make_inputs(jax.random.PRNGKey(2), batch=2, pos=16, n_head=4,
                              d_model=64, d_vocab=256, shared_heads=False)
    out3 = jax.block_until_ready(
        lense_a_forward(x3, w3, b3, tm_max=16, tn_max=128, tk_max=128))
    ref3 = lense_a_reference(x3, w3, b3)
    assert out3.shape == (2, 16, 256)
    assert jnp.allclose(out3, ref3, atol=2e-2, rtol=2e-2), float(
        jnp.max(jnp.abs(out3 - ref3)))

    print("KERNEL_OK")
</pallas_src>

<mosaic_0001>
module attributes {stable_mosaic.version = 11 : i64} {
  func.func @_lense_a_kernel(%arg0: i32, %arg1: i32, %arg2: i32, %arg3: memref<16x128xbf16, #tpu.memory_space<vmem>>, %arg4: memref<128x128xbf16, #tpu.memory_space<vmem>>, %arg5: memref<1x128xf32, #tpu.memory_space<vmem>>, %arg6: memref<16x128xf32, #tpu.memory_space<vmem>>) attributes {dimension_semantics = [#tpu.dimension_semantics<parallel>, #tpu.dimension_semantics<parallel>, #tpu.dimension_semantics<arbitrary>], iteration_bounds = array<i64: 1, 1, 1>, scalar_prefetch = 0 : i64, scratch_operands = 0 : i64, tpu.core_type = #tpu.core_type<tc>, window_params = [{transform_indices = @transform_0, window_bounds = array<i64: 16, 128>}, {transform_indices = @transform_1, window_bounds = array<i64: 128, 128>}, {transform_indices = @transform_2, window_bounds = array<i64: 1, 128>}, {transform_indices = @transform_3, window_bounds = array<i64: 16, 128>}]} {
    %c0_i32 = arith.constant 0 : i32
    %0 = arith.cmpi eq, %arg2, %c0_i32 : i32
    %1 = arith.extui %0 : i1 to i32
    %c0_i32_0 = arith.constant 0 : i32
    %2 = arith.cmpi ne, %1, %c0_i32_0 : i32
    scf.if %2 {
      %c0_8 = arith.constant 0 : index
      %c0_9 = arith.constant 0 : index
      %9 = vector.load %arg5[%c0_8, %c0_9] : memref<1x128xf32, #tpu.memory_space<vmem>>, vector<1x128xf32>
      %10 = vector.shape_cast %9 : vector<1x128xf32> to vector<1x128xf32>
      %11 = vector.broadcast %10 : vector<1x128xf32> to vector<16x128xf32>
      %c0_10 = arith.constant 0 : index
      %c0_11 = arith.constant 0 : index
      %12 = vector.load %arg6[%c0_10, %c0_11] : memref<16x128xf32, #tpu.memory_space<vmem>>, vector<16x128xf32>
      tpu.vector_store %arg6[%c0_10, %c0_11], %11 {strides = array<i32>} : memref<16x128xf32, #tpu.memory_space<vmem>>, vector<16x128xf32>,
    } else {
    }
    %c0 = arith.constant 0 : index
    %c0_1 = arith.constant 0 : index
    %3 = vector.load %arg6[%c0, %c0_1] : memref<16x128xf32, #tpu.memory_space<vmem>>, vector<16x128xf32>
    %c0_2 = arith.constant 0 : index
    %c0_3 = arith.constant 0 : index
    %4 = vector.load %arg3[%c0_2, %c0_3] : memref<16x128xbf16, #tpu.memory_space<vmem>>, vector<16x128xbf16>
    %c0_4 = arith.constant 0 : index
    %c0_5 = arith.constant 0 : index
    %5 = vector.load %arg4[%c0_4, %c0_5] : memref<128x128xbf16, #tpu.memory_space<vmem>>, vector<128x128xbf16>
    %cst = arith.constant dense<0.000000e+00> : vector<16x128xf32>
    %6 = tpu.matmul %4, %5, %cst {dimension_numbers = #tpu.dot_dimension_numbers<[1], [0], [0], [1], [0, 0, 1, 1], [], []>} : vector<16x128xbf16>, vector<128x128xbf16>, vector<16x128xf32> -> vector<16x128xf32>
    %7 = arith.addf %3, %6 : vector<16x128xf32>
    %c0_6 = arith.constant 0 : index
    %c0_7 = arith.constant 0 : index
    %8 = vector.load %arg6[%c0_6, %c0_7] : memref<16x128xf32, #tpu.memory_space<vmem>>, vector<16x128xf32>
    tpu.vector_store %arg6[%c0_6, %c0_7], %7 {strides = array<i32>} : memref<16x128xf32, #tpu.memory_space<vmem>>, vector<16x128xf32>,
    return
  }
  func.func @transform_0(%arg0: i32, %arg1: i32, %arg2: i32) -> (i32, i32) {
    %c0_i32 = arith.constant 0 : i32
    return %arg0, %arg2 : i32, i32
  }
  func.func @transform_1(%arg0: i32, %arg1: i32, %arg2: i32) -> (i32, i32) {
    %c0_i32 = arith.constant 0 : i32
    return %arg2, %arg1 : i32, i32
  }
  func.func @transform_2(%arg0: i32, %arg1: i32, %arg2: i32) -> (i32, i32) {
    %c0_i32 = arith.constant 0 : i32
    %c0_i32_0 = arith.constant 0 : i32
    return %c0_i32, %arg1 : i32, i32
  }
  func.func @transform_3(%arg0: i32, %arg1: i32, %arg2: i32) -> (i32, i32) {
    %c0_i32 = arith.constant 0 : i32
    return %arg0, %arg1 : i32, i32
  }
}

</mosaic_0001>

<llo_original>
// kernel: lense_a_forward.1
$region0: #{lense_a_forward.1}
  #allocation0 [shape = 'u32[]', space=smem, size = 0x4, offset = 0x4, fixed_abs, tag = 'smem constant byte address 0x4 - core index']
  #allocation1 [shape = 'u32[144,128]{1,0:T(1,128)}', space=vmem, size = 0x12000, scoped, tag = 'internal scratch']
  %s0 = inlined_call_operand.vmem [shape: bf16[16,128], index: 0, kind: input, shape index: {}]
  %s1 = inlined_call_operand.vmem [shape: bf16[128,128], index: 1, kind: input, shape index: {}]
  %s2 = inlined_call_operand.vmem [shape: f32[1,128], index: 2, kind: input, shape index: {}]
  %s3 = inlined_call_operand.hbm [shape: f32[16,128], index: 3, kind: output, shape index: {}]
  %s4 = sld [smem:[#allocation0]]
  $region26: #{lense_a_forward.1} parent=0
    _
  %s6 = ssub.s32 1, %s4
  %s7 = scalar_select 0, %s6, %s4
  $region1: #{lense_a_forward.1} parent=0
    #allocation2 [shape = 'u8[8192]{0}', space=vmem, size = 0x2000, scoped, tag = 'output window, operand 0, single buffered']
    #allocation3 [shape = 's32[1]{0}', space=sflag, size = 0x4, scoped, tag = 'scoped memory for lense_a_forward.1']
    %8 = vsyncpa [#allocation3], 0
    // Predicated region
    $region2: #{lense_a_forward.1} parent=1 // pred_check
      _
    $region3: #{lense_a_forward.1} parent=1 // pred_check_branch
      %10 = sbr.rel (0) target = $region5
    $region4: #{lense_a_forward.1} parent=1 // pred_region
      _
    $region5: #{lense_a_forward.1} parent=1 // pred_fallthru
      _
    // Predicated region
    $region6: #{lense_a_forward.1} parent=1 // pred_check
      _
    $region7: #{lense_a_forward.1} parent=1 // pred_check_branch
      %12 = sbr.rel (0) target = $region9
    $region8: #{lense_a_forward.1} parent=1 // pred_region
      _
    $region9: #{lense_a_forward.1} parent=1 // pred_fallthru
      _
    // Predicated region
    $region10: #{lense_a_forward.1} parent=1 // pred_check
      _
    $region11: #{lense_a_forward.1} parent=1 // pred_check_branch
      %14 = sbr.rel (0) target = $region13
    $region12: #{lense_a_forward.1} parent=1 // pred_region
      _
    $region13: #{lense_a_forward.1} parent=1 // pred_fallthru
      _
    %p16 = scmp.eq.s32.totalorder 0, 0
    // Predicated region
    $region14: #{lense_a_forward.1} parent=1 // pred_check
      %p17 = pneg %p16
    $region15: #{lense_a_forward.1} parent=1 // pred_check_branch
      %19 = sbr.rel (%p17) target = $region17
    $region16: #{lense_a_forward.1} parent=1 // pred_region
      %v20 = vld [vmem:[%s2] sm:$0x1]
      %v22 = vlaneseq
      %v23 = vshrl.u32 %v22, 7
      %v24 = vsub.s32 0, %v23
      %v25 = vrot.slane %v20, %v24
      %27 = vst [vmem:[#allocation2] sm:$0xff] %v25
      %28 = vst [vmem:[#allocation2 + $0x8] sm:$0xff] %v25
    $region17: #{lense_a_forward.1} parent=1 // pred_fallthru
      _
    %v29 = vld [vmem:[#allocation2] sm:$0xff]
    %v30 = vld [vmem:[#allocation2 + $0x8] sm:$0xff]
    %v31 = vld [vmem:[%s0] sm:$0xf]
    %v32 = vld [vmem:[%s0 + $0x4] sm:$0xf]
    %v33 = vld [vmem:[%s1] sm:$0xf]
    %v34 = vld [vmem:[%s1 + $0x4] sm:$0xf]
    %v35 = vld [vmem:[%s1 + $0x8] sm:$0xf]
    %v36 = vld [vmem:[%s1 + $0xc] sm:$0xf]
    %v37 = vld [vmem:[%s1 + $0x10] sm:$0xf]
    %v38 = vld [vmem:[%s1 + $0x14] sm:$0xf]
    %v39 = vld [vmem:[%s1 + $0x18] sm:$0xf]
    %v40 = vld [vmem:[%s1 + $0x1c] sm:$0xf]
    %v41 = vld [vmem:[%s1 + $0x20] sm:$0xf]
    %v42 = vld [vmem:[%s1 + $0x24] sm:$0xf]
    %v43 = vld [vmem:[%s1 + $0x28] sm:$0xf]
    %v44 = vld [vmem:[%s1 + $0x2c] sm:$0xf]
    %v45 = vld [vmem:[%s1 + $0x30] sm:$0xf]
    %v46 = vld [vmem:[%s1 + $0x34] sm:$0xf]
    %v47 = vld [vmem:[%s1 + $0x38] sm:$0xf]
    %v48 = vld [vmem:[%s1 + $0x3c] sm:$0xf]
    %v51 = vunpack.c.l.b16 %v31
    %v52 = vunpack.c.l.b16 %v32
    %v53 = vpack.c.b16 %v52, %v51
    %v71 = vunpack.c.l.b16 %v33
    %v72 = vunpack.c.l.b16 %v34
    %v73 = vunpack.c.l.b16 %v35
    %v74 = vunpack.c.l.b16 %v36
    %v75 = vunpack.c.l.b16 %v37
    %v76 = vunpack.c.l.b16 %v38
    %v77 = vunpack.c.l.b16 %v39
    %v78 = vunpack.c.l.b16 %v40
    %v79 = vunpack.c.l.b16 %v41
    %v80 = vunpack.c.l.b16 %v42
    %v81 = vunpack.c.l.b16 %v43
    %v82 = vunpack.c.l.b16 %v44
    %v83 = vunpack.c.l.b16 %v45
    %v84 = vunpack.c.l.b16 %v46
    %v85 = vunpack.c.l.b16 %v47
    %v86 = vunpack.c.l.b16 %v48
    %v87 = vpack.c.b16 %v72, %v71
    %v88 = vpack.c.b16 %v74, %v73
    %v89 = vpack.c.b16 %v76, %v75
    %v90 = vpack.c.b16 %v78, %v77
    %v91 = vpack.c.b16 %v80, %v79
    %v92 = vpack.c.b16 %v82, %v81
    %v93 = vpack.c.b16 %v84, %v83
    %v94 = vpack.c.b16 %v86, %v85
    %103 = vmatprep.subr.bf16.mxu0 0
    %104 = vmatpush1.bf16.msra.mxu0 %v87
    %105 = vmatprep.subr.bf16.mxu0 0
    %106 = vmatpush1.bf16.msra.mxu0 %v88
    %107 = vmatprep.subr.bf16.mxu0 0
    %108 = vmatpush1.bf16.msra.mxu0 %v89
    %109 = vmatprep.subr.bf16.mxu0 0
    %110 = vmatpush1.bf16.msra.mxu0 %v90
    %111 = vmatprep.subr.bf16.mxu0 0
    %112 = vmatpush1.bf16.msra.mxu0 %v91
    %113 = vmatprep.subr.bf16.mxu0 0
    %114 = vmatpush1.bf16.msra.mxu0 %v92
    %115 = vmatprep.subr.bf16.mxu0 0
    %116 = vmatpush1.bf16.msra.mxu0 %v93
    %117 = vmatprep.subr.bf16.mxu0 0
    %118 = vmatpush1.bf16.msra.mxu0 %v94
    %119 = vmatprep.subr.bf16.mxu0 0
    %120 = vmatpush1.bf16.msra.mxu0 0
    %121 = vmatprep.subr.bf16.mxu0 0
    %122 = vmatpush1.bf16.msra.mxu0 0
    %123 = vmatprep.subr.bf16.mxu0 0
    %124 = vmatpush1.bf16.msra.mxu0 0
    %125 = vmatprep.subr.bf16.mxu0 0
    %126 = vmatpush1.bf16.msra.mxu0 0
    %127 = vmatprep.subr.bf16.mxu0 0
    %128 = vmatpush1.bf16.msra.mxu0 0
    %129 = vmatprep.subr.bf16.mxu0 0
    %130 = vmatpush1.bf16.msra.mxu0 0
    %131 = vmatprep.subr.bf16.mxu0 0
    %132 = vmatpush1.bf16.msra.mxu0 0
    %133 = vmatprep.subr.bf16.mxu0 0
    %134 = vmatpush1.bf16.msra.mxu0 0
    %135 = vmatprep.mubr.bf16.mxu0 0
    %136 = vmatmul.mubr.bf16.gmra.mrb[0].mxu0 %v53
    %v137 = vpop.f32.mrb[0].mxu0
    %v138 = vadd.f32 0.0, %v137
    %v139 = vpop.f32.mrb[0].mxu0
    %v140 = vpop.f32.mrb[0].mxu0
    %v141 = vadd.f32 0.0, %v140
    %v142 = vpop.f32.mrb[0].mxu0
    %143 = vdwg.mxu0
    %v144 = vadd.f32 %v29, %v138
    %v145 = vadd.f32 %v30, %v141
    %146 = vst [vmem:[#allocation2] sm:$0xff] %v144
    %147 = vst [vmem:[#allocation2 + $0x8] sm:$0xff] %v145
    // Predicated region
    $region18: #{lense_a_forward.1} parent=1 // pred_check
      _
    $region19: #{lense_a_forward.1} parent=1 // pred_check_branch
      %149 = sbr.rel (0) target = $region21
    $region20: #{lense_a_forward.1} parent=1 // pred_region
      %s151 = ssub.s32 256, 256
      %152 = vsyncadd [#allocation3], %s151
      %s153 = sshll.u32 [#allocation2], 4
      %s154 = int_to_ptr.vmem [resolvable:$true] %s153
      %159 = dma.vmem_to_hbm [thread:$0]  %s154, 256, %s3, [#allocation3], 128, 128, 8
    $region21: #{lense_a_forward.1} parent=1 // pred_fallthru
      _
    // Predicated region
    $region22: #{lense_a_forward.1} parent=1 // pred_check
      _
    $region23: #{lense_a_forward.1} parent=1 // pred_check_branch
      %161 = sbr.rel (0) target = $region25
    $region24: #{lense_a_forward.1} parent=1 // pred_region
      %162 = dma.done [#allocation3], 256
    $region25: #{lense_a_forward.1} parent=1 // pred_fallthru
      _
    %163 = vsyncpa [#allocation3], 1

</llo_original>
